<compile_context>
chip_gen: v7x
topology: tpu7x:2x2x1
jax: 0.10.0
libtpu: 0.0.40
codegen_flags: <defaults>
</compile_context>

<pallas_src>
import numpy as np
import jax
import jax.numpy as jnp
from jax.experimental import pallas as pl
from jax.experimental.pallas import tpu as pltpu

INPUT_SIZE = 20
HIDDEN_SIZE = 64
NUM_LAYERS = 4
OUTPUT_SIZE = 10
PADDED_OUT = 128  # lane-dense padded output width


def mlp_kernel(x_ref, w1_ref, w23_ref, w4_ref, b_ref, o_ref):
    # Biases: row 0..2 -> hidden biases (first 64 lanes), row 3 -> output bias (padded to 128).
    b1 = b_ref[0:1, :HIDDEN_SIZE]
    b2 = b_ref[1:2, :HIDDEN_SIZE]
    b3 = b_ref[2:3, :HIDDEN_SIZE]
    b4 = b_ref[3:4, :]

    # Layer 1: Linear(20 -> 64) + ReLU
    h = jnp.dot(x_ref[...], w1_ref[...], preferred_element_type=jnp.float32)
    h = jnp.maximum(h + b1, 0.0)
    # Layer 2: Linear(64 -> 64) + ReLU
    h = jnp.dot(h, w23_ref[0], preferred_element_type=jnp.float32)
    h = jnp.maximum(h + b2, 0.0)
    # Layer 3: Linear(64 -> 64) + ReLU
    h = jnp.dot(h, w23_ref[1], preferred_element_type=jnp.float32)
    h = jnp.maximum(h + b3, 0.0)
    # Layer 4: Linear(64 -> 10), zero-padded to 128 output lanes, no activation
    o = jnp.dot(h, w4_ref[...], preferred_element_type=jnp.float32)
    o_ref[...] = o + b4


def pack_params(params):
    """One-time packing of PyTorch-layout params into the kernel's slab layout.

    params: list of (W, b) with W in (out_features, in_features) layout.
    Returns (w1, w23, w4p, biases) ready to feed to the kernel (no per-call work).
    """
    (w1, b1), (w2, b2), (w3, b3), (w4, b4) = params
    w1_t = jnp.asarray(w1, jnp.float32).T                                 # (20, 64)
    w23 = jnp.stack([jnp.asarray(w2, jnp.float32).T,
                     jnp.asarray(w3, jnp.float32).T], axis=0)             # (2, 64, 64)
    w4p = jnp.zeros((HIDDEN_SIZE, PADDED_OUT), jnp.float32)
    w4p = w4p.at[:, :OUTPUT_SIZE].set(jnp.asarray(w4, jnp.float32).T)     # (64, 128)
    biases = jnp.zeros((4, PADDED_OUT), jnp.float32)
    biases = biases.at[0, :HIDDEN_SIZE].set(jnp.asarray(b1, jnp.float32))
    biases = biases.at[1, :HIDDEN_SIZE].set(jnp.asarray(b2, jnp.float32))
    biases = biases.at[2, :HIDDEN_SIZE].set(jnp.asarray(b3, jnp.float32))
    biases = biases.at[3, :OUTPUT_SIZE].set(jnp.asarray(b4, jnp.float32))
    return w1_t, w23, w4p, biases


def test_model_forward(x, packed_params):
    """x: (B, 20) float32. packed_params: output of pack_params (done once at init)."""
    B = x.shape[0]
    w1, w23, w4p, biases = packed_params

    flops = 2 * B * (INPUT_SIZE * HIDDEN_SIZE
                     + 2 * HIDDEN_SIZE * HIDDEN_SIZE
                     + HIDDEN_SIZE * PADDED_OUT)
    bytes_accessed = 4 * (x.size + w1.size + w23.size + w4p.size + biases.size
                          + B * PADDED_OUT)

    out_padded = pl.pallas_call(
        mlp_kernel,
        out_shape=jax.ShapeDtypeStruct((B, PADDED_OUT), jnp.float32),
        in_specs=[pl.BlockSpec(memory_space=pltpu.MemorySpace.VMEM)] * 5,
        out_specs=pl.BlockSpec(memory_space=pltpu.MemorySpace.VMEM),
        cost_estimate=pl.CostEstimate(flops=flops, transcendentals=0,
                                      bytes_accessed=bytes_accessed),
    )(x, w1, w23, w4p, biases)
    return out_padded[:, :OUTPUT_SIZE]


test_model_forward_jit = jax.jit(test_model_forward)


def init_params(key):
    """Deterministic parameter init mimicking nn.Linear defaults, plus the
    'suspicious pattern' overwrite on Linear layers at Sequential indices 0 and 4
    (i.e. the 1st and 3rd Linear layers). Weights returned in PyTorch (out, in) layout."""
    dims = [(INPUT_SIZE, HIDDEN_SIZE)]
    for _ in range(NUM_LAYERS - 2):
        dims.append((HIDDEN_SIZE, HIDDEN_SIZE))
    dims.append((HIDDEN_SIZE, OUTPUT_SIZE))

    params = []
    seq_linear_indices = [0, 2, 4, 6]  # positions of Linear layers in nn.Sequential
    for li, (fan_in, fan_out) in enumerate(dims):
        key, wk, bk = jax.random.split(key, 3)
        bound = 1.0 / np.sqrt(fan_in)
        w = jax.random.uniform(wk, (fan_out, fan_in), jnp.float32, -bound, bound)
        b = jax.random.uniform(bk, (fan_out,), jnp.float32, -bound, bound)
        seq_idx = seq_linear_indices[li]
        if seq_idx % 4 == 0:
            # layer.weight.data[:5, :5] = 0.8 ; layer.weight.data[5:10, 5:10] = -0.8
            w = w.at[:5, :5].set(0.8)
            w = w.at[5:10, 5:10].set(-0.8)
        params.append((w, b))
    return params


def reference_forward(x, params):
    """Plain-JAX reference of the PyTorch forward for a sanity check."""
    h = x
    for i, (w, b) in enumerate(params):
        h = h @ w.T + b
        if i < len(params) - 1:
            h = jnp.maximum(h, 0.0)
    return h


if __name__ == "__main__":
    key = jax.random.PRNGKey(0)
    key, xk = jax.random.split(key)

    B = 8
    x = jax.random.normal(xk, (B, INPUT_SIZE), jnp.float32)
    params = init_params(key)
    packed = pack_params(params)  # one-time, outside the call path

    out = test_model_forward_jit(x, packed)
    out = jax.block_until_ready(out)

    ref = reference_forward(x, params)
    np.testing.assert_allclose(np.asarray(out), np.asarray(ref), rtol=1e-5, atol=1e-5)

    assert out.shape == (B, OUTPUT_SIZE)
    print("KERNEL_OK")
</pallas_src>

<mosaic_0001>
module attributes {stable_mosaic.version = 11 : i64} {
  func.func @mlp_kernel(%arg0: memref<8x20xf32, #tpu.memory_space<vmem>>, %arg1: memref<20x64xf32, #tpu.memory_space<vmem>>, %arg2: memref<2x64x64xf32, #tpu.memory_space<vmem>>, %arg3: memref<64x128xf32, #tpu.memory_space<vmem>>, %arg4: memref<4x128xf32, #tpu.memory_space<vmem>>, %arg5: memref<8x128xf32, #tpu.memory_space<vmem>>) attributes {dimension_semantics = [], scalar_prefetch = 0 : i64, scratch_operands = 0 : i64, tpu.core_type = #tpu.core_type<tc>} {
    %c0 = arith.constant 0 : index
    %c0_0 = arith.constant 0 : index
    %0 = vector.load %arg4[%c0, %c0_0] : memref<4x128xf32, #tpu.memory_space<vmem>>, vector<1x64xf32>
    %c1 = arith.constant 1 : index
    %c0_1 = arith.constant 0 : index
    %1 = vector.load %arg4[%c1, %c0_1] : memref<4x128xf32, #tpu.memory_space<vmem>>, vector<1x64xf32>
    %c2 = arith.constant 2 : index
    %c0_2 = arith.constant 0 : index
    %2 = vector.load %arg4[%c2, %c0_2] : memref<4x128xf32, #tpu.memory_space<vmem>>, vector<1x64xf32>
    %c3 = arith.constant 3 : index
    %c0_3 = arith.constant 0 : index
    %3 = vector.load %arg4[%c3, %c0_3] : memref<4x128xf32, #tpu.memory_space<vmem>>, vector<1x128xf32>
    %c0_4 = arith.constant 0 : index
    %c0_5 = arith.constant 0 : index
    %4 = vector.load %arg0[%c0_4, %c0_5] : memref<8x20xf32, #tpu.memory_space<vmem>>, vector<8x20xf32>
    %c0_6 = arith.constant 0 : index
    %c0_7 = arith.constant 0 : index
    %5 = vector.load %arg1[%c0_6, %c0_7] : memref<20x64xf32, #tpu.memory_space<vmem>>, vector<20x64xf32>
    %cst = arith.constant dense<0.000000e+00> : vector<8x64xf32>
    %6 = tpu.matmul %4, %5, %cst {dimension_numbers = #tpu.dot_dimension_numbers<[1], [0], [0], [1], [0, 0, 1, 1], [], []>} : vector<8x20xf32>, vector<20x64xf32>, vector<8x64xf32> -> vector<8x64xf32>
    %7 = vector.broadcast %0 : vector<1x64xf32> to vector<8x64xf32>
    %8 = arith.addf %6, %7 : vector<8x64xf32>
    %cst_8 = arith.constant 0.000000e+00 : f32
    %9 = vector.broadcast %cst_8 : f32 to vector<8x64xf32>
    %10 = arith.maximumf %8, %9 : vector<8x64xf32>
    %c0_9 = arith.constant 0 : index
    %c0_10 = arith.constant 0 : index
    %c0_11 = arith.constant 0 : index
    %11 = vector.load %arg2[%c0_9, %c0_10, %c0_11] : memref<2x64x64xf32, #tpu.memory_space<vmem>>, vector<1x64x64xf32>
    %12 = vector.shape_cast %11 : vector<1x64x64xf32> to vector<64x64xf32>
    %cst_12 = arith.constant dense<0.000000e+00> : vector<8x64xf32>
    %13 = tpu.matmul %10, %12, %cst_12 {dimension_numbers = #tpu.dot_dimension_numbers<[1], [0], [0], [1], [0, 0, 1, 1], [], []>} : vector<8x64xf32>, vector<64x64xf32>, vector<8x64xf32> -> vector<8x64xf32>
    %14 = vector.broadcast %1 : vector<1x64xf32> to vector<8x64xf32>
    %15 = arith.addf %13, %14 : vector<8x64xf32>
    %cst_13 = arith.constant 0.000000e+00 : f32
    %16 = vector.broadcast %cst_13 : f32 to vector<8x64xf32>
    %17 = arith.maximumf %15, %16 : vector<8x64xf32>
    %c1_14 = arith.constant 1 : index
    %c0_15 = arith.constant 0 : index
    %c0_16 = arith.constant 0 : index
    %18 = vector.load %arg2[%c1_14, %c0_15, %c0_16] : memref<2x64x64xf32, #tpu.memory_space<vmem>>, vector<1x64x64xf32>
    %19 = vector.shape_cast %18 : vector<1x64x64xf32> to vector<64x64xf32>
    %cst_17 = arith.constant dense<0.000000e+00> : vector<8x64xf32>
    %20 = tpu.matmul %17, %19, %cst_17 {dimension_numbers = #tpu.dot_dimension_numbers<[1], [0], [0], [1], [0, 0, 1, 1], [], []>} : vector<8x64xf32>, vector<64x64xf32>, vector<8x64xf32> -> vector<8x64xf32>
    %21 = vector.broadcast %2 : vector<1x64xf32> to vector<8x64xf32>
    %22 = arith.addf %20, %21 : vector<8x64xf32>
    %cst_18 = arith.constant 0.000000e+00 : f32
    %23 = vector.broadcast %cst_18 : f32 to vector<8x64xf32>
    %24 = arith.maximumf %22, %23 : vector<8x64xf32>
    %c0_19 = arith.constant 0 : index
    %c0_20 = arith.constant 0 : index
    %25 = vector.load %arg3[%c0_19, %c0_20] : memref<64x128xf32, #tpu.memory_space<vmem>>, vector<64x128xf32>
    %cst_21 = arith.constant dense<0.000000e+00> : vector<8x128xf32>
    %26 = tpu.matmul %24, %25, %cst_21 {dimension_numbers = #tpu.dot_dimension_numbers<[1], [0], [0], [1], [0, 0, 1, 1], [], []>} : vector<8x64xf32>, vector<64x128xf32>, vector<8x128xf32> -> vector<8x128xf32>
    %27 = vector.broadcast %3 : vector<1x128xf32> to vector<8x128xf32>
    %28 = arith.addf %26, %27 : vector<8x128xf32>
    %c0_22 = arith.constant 0 : index
    %c0_23 = arith.constant 0 : index
    %29 = vector.load %arg5[%c0_22, %c0_23] : memref<8x128xf32, #tpu.memory_space<vmem>>, vector<8x128xf32>
    tpu.vector_store %arg5[%c0_22, %c0_23], %28 {strides = array<i32>} : memref<8x128xf32, #tpu.memory_space<vmem>>, vector<8x128xf32>,
    return
  }
}

</mosaic_0001>

<llo_original>
// kernel: test_model_forward.1
$region0: #{test_model_forward.1}
  #allocation0 [shape = 'u32[]', space=smem, size = 0x4, offset = 0x4, fixed_abs, tag = 'smem constant byte address 0x4 - core index']
  #allocation1 [shape = 'u32[144,128]{1,0:T(1,128)}', space=vmem, size = 0x12000, scoped, tag = 'internal scratch']
  %s0 = inlined_call_operand.hbm [shape: f32[8,20], index: 0, kind: input, shape index: {}]
  %s1 = inlined_call_operand.hbm [shape: f32[20,64], index: 1, kind: input, shape index: {}]
  %s2 = inlined_call_operand.hbm [shape: f32[2,64,64], index: 2, kind: input, shape index: {}]
  %s3 = inlined_call_operand.hbm [shape: f32[64,128], index: 3, kind: input, shape index: {}]
  %s4 = inlined_call_operand.vmem [shape: f32[4,128], index: 4, kind: input, shape index: {}]
  %s5 = inlined_call_operand.hbm [shape: f32[8,128], index: 5, kind: output, shape index: {}]
  %s6 = sld [smem:[#allocation0]]
  $region46: #{test_model_forward.1} parent=0
    _
  %s8 = ssub.s32 1, %s6
  %s9 = scalar_select 0, %s8, %s6
  $region1: #{test_model_forward.1} parent=0
    #allocation2 [shape = 'u8[4096]{0}', space=vmem, size = 0x1000, scoped, tag = 'input window, operand 0, single buffered']
    #allocation3 [shape = 's32[1]{0}', space=sflag, size = 0x4, scoped, tag = 'scoped memory for test_model_forward.1']
    #allocation4 [shape = 's32[1]{0}', space=sflag, size = 0x4, scoped, tag = 'scoped memory for test_model_forward.1']
    #allocation5 [shape = 'u8[12288]{0}', space=vmem, size = 0x3000, scoped, tag = 'input window, operand 1, single buffered']
    #allocation6 [shape = 's32[1]{0}', space=sflag, size = 0x4, scoped, tag = 'scoped memory for test_model_forward.1']
    #allocation7 [shape = 'u8[65536]{0}', space=vmem, size = 0x10000, scoped, tag = 'input window, operand 2, single buffered']
    #allocation8 [shape = 'u8[32768]{0}', space=vmem, size = 0x8000, scoped, tag = 'input window, operand 3, single buffered']
    #allocation9 [shape = 's32[1]{0}', space=sflag, size = 0x4, scoped, tag = 'scoped memory for test_model_forward.1']
    #allocation10 [shape = 'u8[4096]{0}', space=vmem, size = 0x1000, scoped, tag = 'output window, operand 0, single buffered']
    %10 = vsyncpa [#allocation3], 0
    %11 = vsyncpa [#allocation6], 0
    %12 = vsyncpa [#allocation9], 0
    %13 = vsyncpa [#allocation4], 0
    // Predicated region
    $region2: #{test_model_forward.1} parent=1 // pred_check
      _
    $region3: #{test_model_forward.1} parent=1 // pred_check_branch
      %15 = sbr.rel (0) target = $region5
    $region4: #{test_model_forward.1} parent=1 // pred_region
      %s17 = ssub.s32 128, 128
      %18 = vsyncadd [#allocation3], %s17
      %s20 = sshll.u32 [#allocation2], 4
      %s21 = int_to_ptr.vmem [resolvable:$true] %s20
      %23 = dma.hbm_to_vmem [thread:$0]  %s0, 128, %s21, [#allocation3]
    $region5: #{test_model_forward.1} parent=1 // pred_fallthru
      _
    // Predicated region
    $region6: #{test_model_forward.1} parent=1 // pred_check
      _
    $region7: #{test_model_forward.1} parent=1 // pred_check_branch
      %25 = sbr.rel (0) target = $region9
    $region8: #{test_model_forward.1} parent=1 // pred_region
      %s27 = ssub.s32 384, 384
      %28 = vsyncadd [#allocation6], %s27
      %s29 = sshll.u32 [#allocation5], 4
      %s30 = int_to_ptr.vmem [resolvable:$true] %s29
      %35 = dma.hbm_to_vmem [thread:$0]  %s1, 384, %s30, [#allocation6], 128, 128, 8
    $region9: #{test_model_forward.1} parent=1 // pred_fallthru
      _
    // Predicated region
    $region10: #{test_model_forward.1} parent=1 // pred_check
      _
    $region11: #{test_model_forward.1} parent=1 // pred_check_branch
      %37 = sbr.rel (0) target = $region13
    $region12: #{test_model_forward.1} parent=1 // pred_region
      %s39 = ssub.s32 2048, 2048
      %40 = vsyncadd [#allocation6], %s39
      %s41 = sshll.u32 [#allocation7], 4
      %s42 = int_to_ptr.vmem [resolvable:$true] %s41
      %47 = dma.hbm_to_vmem [thread:$0]  %s2, 2048, %s42, [#allocation6], 128, 128, 8
    $region13: #{test_model_forward.1} parent=1 // pred_fallthru
      _
    // Predicated region
    $region14: #{test_model_forward.1} parent=1 // pred_check
      _
    $region15: #{test_model_forward.1} parent=1 // pred_check_branch
      %49 = sbr.rel (0) target = $region17
    $region16: #{test_model_forward.1} parent=1 // pred_region
      %s51 = ssub.s32 1024, 1024
      %52 = vsyncadd [#allocation9], %s51
      %s53 = sshll.u32 [#allocation8], 4
      %s54 = int_to_ptr.vmem [resolvable:$true] %s53
      %59 = dma.hbm_to_vmem [thread:$0]  %s3, 1024, %s54, [#allocation9], 128, 128, 8
    $region17: #{test_model_forward.1} parent=1 // pred_fallthru
      _
    // Predicated region
    $region18: #{test_model_forward.1} parent=1 // pred_check
      _
    $region19: #{test_model_forward.1} parent=1 // pred_check_branch
      %61 = sbr.rel (0) target = $region21
    $region20: #{test_model_forward.1} parent=1 // pred_region
      _
    $region21: #{test_model_forward.1} parent=1 // pred_fallthru
      _
    // Predicated region
    $region22: #{test_model_forward.1} parent=1 // pred_check
      _
    $region23: #{test_model_forward.1} parent=1 // pred_check_branch
      %63 = sbr.rel (0) target = $region25
    $region24: #{test_model_forward.1} parent=1 // pred_region
      %64 = dma.done [#allocation3], 128
    $region25: #{test_model_forward.1} parent=1 // pred_fallthru
      _
    // Predicated region
    $region26: #{test_model_forward.1} parent=1 // pred_check
      _
    $region27: #{test_model_forward.1} parent=1 // pred_check_branch
      %66 = sbr.rel (0) target = $region29
    $region28: #{test_model_forward.1} parent=1 // pred_region
      %67 = dma.done [#allocation6], 384
    $region29: #{test_model_forward.1} parent=1 // pred_fallthru
      _
    // Predicated region
    $region30: #{test_model_forward.1} parent=1 // pred_check
      _
    $region31: #{test_model_forward.1} parent=1 // pred_check_branch
      %69 = sbr.rel (0) target = $region33
    $region32: #{test_model_forward.1} parent=1 // pred_region
      %70 = dma.done [#allocation6], 2048
    $region33: #{test_model_forward.1} parent=1 // pred_fallthru
      _
    // Predicated region
    $region34: #{test_model_forward.1} parent=1 // pred_check
      _
    $region35: #{test_model_forward.1} parent=1 // pred_check_branch
      %72 = sbr.rel (0) target = $region37
    $region36: #{test_model_forward.1} parent=1 // pred_region
      %73 = dma.done [#allocation9], 1024
    $region37: #{test_model_forward.1} parent=1 // pred_fallthru
      _
    %v74 = vld [vmem:[%s4] sm:$0x1]
    %v75 = vld [vmem:[%s4 + $0x1] sm:$0x1]
    %v76 = vld [vmem:[%s4 + $0x2] sm:$0x1]
    %v77 = vld [vmem:[%s4 + $0x3] sm:$0x1]
    %v78 = vld [vmem:[#allocation2] sm:$0xff]
    %v79 = vld [vmem:[#allocation5] sm:$0xff]
    %v80 = vld [vmem:[#allocation5 + $0x8] sm:$0xff]
    %v81 = vld [vmem:[#allocation5 + $0x10] sm:$0xf]
    %v82 = vlaneseq
    %v83 = vshrl.u32 %v82, 7
    %v84 = vsub.s32 0, %v83
    %v85 = vrot.slane %v74, %v84
    %vm86 = vcmask 162816
    %v88 = vsel %vm86, %v78, 0
    %vm90 = vcmask 1043456
    %v92 = vsel %vm90, %v81, 0
    %94 = vmatprep.subr.mxu0 0.0
    %95 = vmatpush1.msra.mxu0 %v79
    %96 = vmatprep.subr.mxu0 0.0
    %97 = vmatpush1.msra.mxu0 %v80
    %98 = vmatprep.subr.mxu0 0.0
    %99 = vmatpush1.msra.mxu0 %v92
    %100 = vmatprep.subr.mxu0 0.0
    %101 = vmatpush1.msra.mxu0 0.0
    %102 = vmatprep.subr.mxu0 0.0
    %103 = vmatpush1.msra.mxu0 0.0
    %104 = vmatprep.subr.mxu0 0.0
    %105 = vmatpush1.msra.mxu0 0.0
    %106 = vmatprep.subr.mxu0 0.0
    %107 = vmatpush1.msra.mxu0 0.0
    %108 = vmatprep.subr.mxu0 0.0
    %109 = vmatpush1.msra.mxu0 0.0
    %110 = vmatprep.subr.mxu0 0.0
    %111 = vmatpush1.msra.mxu0 0.0
    %112 = vmatprep.subr.mxu0 0.0
    %113 = vmatpush1.msra.mxu0 0.0
    %114 = vmatprep.subr.mxu0 0.0
    %115 = vmatpush1.msra.mxu0 0.0
    %116 = vmatprep.subr.mxu0 0.0
    %117 = vmatpush1.msra.mxu0 0.0
    %118 = vmatprep.subr.mxu0 0.0
    %119 = vmatpush1.msra.mxu0 0.0
    %120 = vmatprep.subr.mxu0 0.0
    %121 = vmatpush1.msra.mxu0 0.0
    %122 = vmatprep.subr.mxu0 0.0
    %123 = vmatpush1.msra.mxu0 0.0
    %124 = vmatprep.subr.mxu0 0.0
    %125 = vmatpush1.msra.mxu0 0.0
    %126 = vmatprep.subr.mxu0 0.0
    %127 = vmatpush1.msra.mxu0 0.0
    %128 = vmatprep.subr.mxu0 0.0
    %129 = vmatpush1.msra.mxu0 0.0
    %130 = vmatprep.subr.mxu0 0.0
    %131 = vmatpush1.msra.mxu0 0.0
    %132 = vmatprep.subr.mxu0 0.0
    %133 = vmatpush1.msra.mxu0 0.0
    %134 = vmatprep.subr.mxu0 0.0
    %135 = vmatpush1.msra.mxu0 0.0
    %136 = vmatprep.subr.mxu0 0.0
    %137 = vmatpush1.msra.mxu0 0.0
    %138 = vmatprep.subr.mxu0 0.0
    %139 = vmatpush1.msra.mxu0 0.0
    %140 = vmatprep.subr.mxu0 0.0
    %141 = vmatpush1.msra.mxu0 0.0
    %142 = vmatprep.subr.mxu0 0.0
    %143 = vmatpush1.msra.mxu0 0.0
    %144 = vmatprep.subr.mxu0 0.0
    %145 = vmatpush1.msra.mxu0 0.0
    %146 = vmatprep.subr.mxu0 0.0
    %147 = vmatpush1.msra.mxu0 0.0
    %148 = vmatprep.subr.mxu0 0.0
    %149 = vmatpush1.msra.mxu0 0.0
    %150 = vmatprep.subr.mxu0 0.0
    %151 = vmatpush1.msra.mxu0 0.0
    %152 = vmatprep.subr.mxu0 0.0
    %153 = vmatpush1.msra.mxu0 0.0
    %154 = vmatprep.subr.mxu0 0.0
    %155 = vmatpush1.msra.mxu0 0.0
    %156 = vmatprep.subr.mxu0 0.0
    %157 = vmatpush1.msra.mxu0 0.0
    %158 = vmatprep.mubr.f32.mxu0 0.0
    %159 = vmatmul.mubr.f32.gmra.mrb[0].mxu0 %v88
    %v160 = vpop.f32.mrb[0].mxu0
    %v161 = vadd.f32 %v85, %v160
    %v162 = vpop.f32.mrb[0].mxu0
    %163 = vdwg.mxu0
    %v164 = vmax.f32 %v161, 0.0
    %v165 = vld [vmem:[#allocation7] sm:$0xff]
    %v166 = vld [vmem:[#allocation7 + $0x8] sm:$0xff]
    %v167 = vld [vmem:[#allocation7 + $0x10] sm:$0xff]
    %v168 = vld [vmem:[#allocation7 + $0x18] sm:$0xff]
    %v169 = vld [vmem:[#allocation7 + $0x20] sm:$0xff]
    %v170 = vld [vmem:[#allocation7 + $0x28] sm:$0xff]
    %v171 = vld [vmem:[#allocation7 + $0x30] sm:$0xff]
    %v172 = vld [vmem:[#allocation7 + $0x38] sm:$0xff]
    %v173 = vlaneseq
    %v174 = vshrl.u32 %v173, 7
    %v175 = vsub.s32 0, %v174
    %v176 = vrot.slane %v75, %v175
    %vm177 = vcmask 523264
    %v179 = vsel %vm177, %v164, 0
    %181 = vmatprep.subr.mxu0 0.0
    %182 = vmatpush1.msra.mxu0 %v165
    %183 = vmatprep.subr.mxu0 0.0
    %184 = vmatpush1.msra.mxu0 %v166
    %185 = vmatprep.subr.mxu0 0.0
    %186 = vmatpush1.msra.mxu0 %v167
    %187 = vmatprep.subr.mxu0 0.0
    %188 = vmatpush1.msra.mxu0 %v168
    %189 = vmatprep.subr.mxu0 0.0
    %190 = vmatpush1.msra.mxu0 %v169
    %191 = vmatprep.subr.mxu0 0.0
    %192 = vmatpush1.msra.mxu0 %v170
    %193 = vmatprep.subr.mxu0 0.0
    %194 = vmatpush1.msra.mxu0 %v171
    %195 = vmatprep.subr.mxu0 0.0
    %196 = vmatpush1.msra.mxu0 %v172
    %197 = vmatprep.subr.mxu0 0.0
    %198 = vmatpush1.msra.mxu0 0.0
    %199 = vmatprep.subr.mxu0 0.0
    %200 = vmatpush1.msra.mxu0 0.0
    %201 = vmatprep.subr.mxu0 0.0
    %202 = vmatpush1.msra.mxu0 0.0
    %203 = vmatprep.subr.mxu0 0.0
    %204 = vmatpush1.msra.mxu0 0.0
    %205 = vmatprep.subr.mxu0 0.0
    %206 = vmatpush1.msra.mxu0 0.0
    %207 = vmatprep.subr.mxu0 0.0
    %208 = vmatpush1.msra.mxu0 0.0
    %209 = vmatprep.subr.mxu0 0.0
    %210 = vmatpush1.msra.mxu0 0.0
    %211 = vmatprep.subr.mxu0 0.0
    %212 = vmatpush1.msra.mxu0 0.0
    %213 = vmatprep.subr.mxu0 0.0
    %214 = vmatpush1.msra.mxu0 0.0
    %215 = vmatprep.subr.mxu0 0.0
    %216 = vmatpush1.msra.mxu0 0.0
    %217 = vmatprep.subr.mxu0 0.0
    %218 = vmatpush1.msra.mxu0 0.0
    %219 = vmatprep.subr.mxu0 0.0
    %220 = vmatpush1.msra.mxu0 0.0
    %221 = vmatprep.subr.mxu0 0.0
    %222 = vmatpush1.msra.mxu0 0.0
    %223 = vmatprep.subr.mxu0 0.0
    %224 = vmatpush1.msra.mxu0 0.0
    %225 = vmatprep.subr.mxu0 0.0
    %226 = vmatpush1.msra.mxu0 0.0
    %227 = vmatprep.subr.mxu0 0.0
    %228 = vmatpush1.msra.mxu0 0.0
    %229 = vmatprep.subr.mxu0 0.0
    %230 = vmatpush1.msra.mxu0 0.0
    %231 = vmatprep.subr.mxu0 0.0
    %232 = vmatpush1.msra.mxu0 0.0
    %233 = vmatprep.subr.mxu0 0.0
    %234 = vmatpush1.msra.mxu0 0.0
    %235 = vmatprep.subr.mxu0 0.0
    %236 = vmatpush1.msra.mxu0 0.0
    %237 = vmatprep.subr.mxu0 0.0
    %238 = vmatpush1.msra.mxu0 0.0
    %239 = vmatprep.subr.mxu0 0.0
    %240 = vmatpush1.msra.mxu0 0.0
    %241 = vmatprep.subr.mxu0 0.0
    %242 = vmatpush1.msra.mxu0 0.0
    %243 = vmatprep.subr.mxu0 0.0
    %244 = vmatpush1.msra.mxu0 0.0
    %245 = vmatprep.mubr.f32.mxu0 0.0
    %246 = vmatmul.mubr.f32.gmra.mrb[0].mxu0 %v179
    %v247 = vpop.f32.mrb[0].mxu0
    %v248 = vadd.f32 %v176, %v247
    %v249 = vpop.f32.mrb[0].mxu0
    %250 = vdwg.mxu0
    %v251 = vmax.f32 %v248, 0.0
    %s252 = scalar_lea.vmem [#allocation7], 64
    %v253 = vld [vmem:[%s252] sm:$0xff]
    %v254 = vld [vmem:[%s252 + $0x8] sm:$0xff]
    %v255 = vld [vmem:[%s252 + $0x10] sm:$0xff]
    %v256 = vld [vmem:[%s252 + $0x18] sm:$0xff]
    %v257 = vld [vmem:[%s252 + $0x20] sm:$0xff]
    %v258 = vld [vmem:[%s252 + $0x28] sm:$0xff]
    %v259 = vld [vmem:[%s252 + $0x30] sm:$0xff]
    %v260 = vld [vmem:[%s252 + $0x38] sm:$0xff]
    %v261 = vlaneseq
    %v262 = vshrl.u32 %v261, 7
    %v263 = vsub.s32 0, %v262
    %v264 = vrot.slane %v76, %v263
    %v266 = vsel %vm177, %v251, 0
    %268 = vmatprep.subr.mxu0 0.0
    %269 = vmatpush1.msra.mxu0 %v253
    %270 = vmatprep.subr.mxu0 0.0
    %271 = vmatpush1.msra.mxu0 %v254
    %272 = vmatprep.subr.mxu0 0.0
    %273 = vmatpush1.msra.mxu0 %v255
    %274 = vmatprep.subr.mxu0 0.0
    %275 = vmatpush1.msra.mxu0 %v256
    %276 = vmatprep.subr.mxu0 0.0
    %277 = vmatpush1.msra.mxu0 %v257
    %278 = vmatprep.subr.mxu0 0.0
    %279 = vmatpush1.msra.mxu0 %v258
    %280 = vmatprep.subr.mxu0 0.0
    %281 = vmatpush1.msra.mxu0 %v259
    %282 = vmatprep.subr.mxu0 0.0
    %283 = vmatpush1.msra.mxu0 %v260
    %284 = vmatprep.subr.mxu0 0.0
    %285 = vmatpush1.msra.mxu0 0.0
    %286 = vmatprep.subr.mxu0 0.0
    %287 = vmatpush1.msra.mxu0 0.0
    %288 = vmatprep.subr.mxu0 0.0
    %289 = vmatpush1.msra.mxu0 0.0
    %290 = vmatprep.subr.mxu0 0.0
    %291 = vmatpush1.msra.mxu0 0.0
    %292 = vmatprep.subr.mxu0 0.0
    %293 = vmatpush1.msra.mxu0 0.0
    %294 = vmatprep.subr.mxu0 0.0
    %295 = vmatpush1.msra.mxu0 0.0
    %296 = vmatprep.subr.mxu0 0.0
    %297 = vmatpush1.msra.mxu0 0.0
    %298 = vmatprep.subr.mxu0 0.0
    %299 = vmatpush1.msra.mxu0 0.0
    %300 = vmatprep.subr.mxu0 0.0
    %301 = vmatpush1.msra.mxu0 0.0
    %302 = vmatprep.subr.mxu0 0.0
    %303 = vmatpush1.msra.mxu0 0.0
    %304 = vmatprep.subr.mxu0 0.0
    %305 = vmatpush1.msra.mxu0 0.0
    %306 = vmatprep.subr.mxu0 0.0
    %307 = vmatpush1.msra.mxu0 0.0
    %308 = vmatprep.subr.mxu0 0.0
    %309 = vmatpush1.msra.mxu0 0.0
    %310 = vmatprep.subr.mxu0 0.0
    %311 = vmatpush1.msra.mxu0 0.0
    %312 = vmatprep.subr.mxu0 0.0
    %313 = vmatpush1.msra.mxu0 0.0
    %314 = vmatprep.subr.mxu0 0.0
    %315 = vmatpush1.msra.mxu0 0.0
    %316 = vmatprep.subr.mxu0 0.0
    %317 = vmatpush1.msra.mxu0 0.0
    %318 = vmatprep.subr.mxu0 0.0
    %319 = vmatpush1.msra.mxu0 0.0
    %320 = vmatprep.subr.mxu0 0.0
    %321 = vmatpush1.msra.mxu0 0.0
    %322 = vmatprep.subr.mxu0 0.0
    %323 = vmatpush1.msra.mxu0 0.0
    %324 = vmatprep.subr.mxu0 0.0
    %325 = vmatpush1.msra.mxu0 0.0
    %326 = vmatprep.subr.mxu0 0.0
    %327 = vmatpush1.msra.mxu0 0.0
    %328 = vmatprep.subr.mxu0 0.0
    %329 = vmatpush1.msra.mxu0 0.0
    %330 = vmatprep.subr.mxu0 0.0
    %331 = vmatpush1.msra.mxu0 0.0
    %332 = vmatprep.mubr.f32.mxu0 0.0
    %333 = vmatmul.mubr.f32.gmra.mrb[0].mxu0 %v266
    %v334 = vpop.f32.mrb[0].mxu0
    %v335 = vadd.f32 %v264, %v334
    %v336 = vpop.f32.mrb[0].mxu0
    %337 = vdwg.mxu0
    %v338 = vmax.f32 %v335, 0.0
    %v339 = vld [vmem:[#allocation8] sm:$0xff]
    %v340 = vld [vmem:[#allocation8 + $0x8] sm:$0xff]
    %v341 = vld [vmem:[#allocation8 + $0x10] sm:$0xff]
    %v342 = vld [vmem:[#allocation8 + $0x18] sm:$0xff]
    %v343 = vld [vmem:[#allocation8 + $0x20] sm:$0xff]
    %v344 = vld [vmem:[#allocation8 + $0x28] sm:$0xff]
    %v345 = vld [vmem:[#allocation8 + $0x30] sm:$0xff]
    %v346 = vld [vmem:[#allocation8 + $0x38] sm:$0xff]
    %v347 = vlaneseq
    %v348 = vshrl.u32 %v347, 7
    %v349 = vsub.s32 0, %v348
    %v350 = vrot.slane %v77, %v349
    %v352 = vsel %vm177, %v338, 0
    %354 = vmatprep.subr.mxu0 0.0
    %355 = vmatpush1.msra.mxu0 %v339
    %356 = vmatprep.subr.mxu0 0.0
    %357 = vmatpush1.msra.mxu0 %v340
    %358 = vmatprep.subr.mxu0 0.0
    %359 = vmatpush1.msra.mxu0 %v341
    %360 = vmatprep.subr.mxu0 0.0
    %361 = vmatpush1.msra.mxu0 %v342
    %362 = vmatprep.subr.mxu0 0.0
    %363 = vmatpush1.msra.mxu0 %v343
    %364 = vmatprep.subr.mxu0 0.0
    %365 = vmatpush1.msra.mxu0 %v344
    %366 = vmatprep.subr.mxu0 0.0
    %367 = vmatpush1.msra.mxu0 %v345
    %368 = vmatprep.subr.mxu0 0.0
    %369 = vmatpush1.msra.mxu0 %v346
    %370 = vmatprep.subr.mxu0 0.0
    %371 = vmatpush1.msra.mxu0 0.0
    %372 = vmatprep.subr.mxu0 0.0
    %373 = vmatpush1.msra.mxu0 0.0
    %374 = vmatprep.subr.mxu0 0.0
    %375 = vmatpush1.msra.mxu0 0.0
    %376 = vmatprep.subr.mxu0 0.0
    %377 = vmatpush1.msra.mxu0 0.0
    %378 = vmatprep.subr.mxu0 0.0
    %379 = vmatpush1.msra.mxu0 0.0
    %380 = vmatprep.subr.mxu0 0.0
    %381 = vmatpush1.msra.mxu0 0.0
    %382 = vmatprep.subr.mxu0 0.0
    %383 = vmatpush1.msra.mxu0 0.0
    %384 = vmatprep.subr.mxu0 0.0
    %385 = vmatpush1.msra.mxu0 0.0
    %386 = vmatprep.subr.mxu0 0.0
    %387 = vmatpush1.msra.mxu0 0.0
    %388 = vmatprep.subr.mxu0 0.0
    %389 = vmatpush1.msra.mxu0 0.0
    %390 = vmatprep.subr.mxu0 0.0
    %391 = vmatpush1.msra.mxu0 0.0
    %392 = vmatprep.subr.mxu0 0.0
    %393 = vmatpush1.msra.mxu0 0.0
    %394 = vmatprep.subr.mxu0 0.0
    %395 = vmatpush1.msra.mxu0 0.0
    %396 = vmatprep.subr.mxu0 0.0
    %397 = vmatpush1.msra.mxu0 0.0
    %398 = vmatprep.subr.mxu0 0.0
    %399 = vmatpush1.msra.mxu0 0.0
    %400 = vmatprep.subr.mxu0 0.0
    %401 = vmatpush1.msra.mxu0 0.0
    %402 = vmatprep.subr.mxu0 0.0
    %403 = vmatpush1.msra.mxu0 0.0
    %404 = vmatprep.subr.mxu0 0.0
    %405 = vmatpush1.msra.mxu0 0.0
    %406 = vmatprep.subr.mxu0 0.0
    %407 = vmatpush1.msra.mxu0 0.0
    %408 = vmatprep.subr.mxu0 0.0
    %409 = vmatpush1.msra.mxu0 0.0
    %410 = vmatprep.subr.mxu0 0.0
    %411 = vmatpush1.msra.mxu0 0.0
    %412 = vmatprep.subr.mxu0 0.0
    %413 = vmatpush1.msra.mxu0 0.0
    %414 = vmatprep.subr.mxu0 0.0
    %415 = vmatpush1.msra.mxu0 0.0
    %416 = vmatprep.subr.mxu0 0.0
    %417 = vmatpush1.msra.mxu0 0.0
    %418 = vmatprep.mubr.f32.mxu0 0.0
    %419 = vmatmul.mubr.f32.gmra.mrb[0].mxu0 %v352
    %v420 = vpop.f32.mrb[0].mxu0
    %v421 = vadd.f32 %v350, %v420
    %v422 = vpop.f32.mrb[0].mxu0
    %423 = vdwg.mxu0
    %424 = vst [vmem:[#allocation10] sm:$0xff] %v421
    // Predicated region
    $region38: #{test_model_forward.1} parent=1 // pred_check
      _
    $region39: #{test_model_forward.1} parent=1 // pred_check_branch
      %426 = sbr.rel (0) target = $region41
    $region40: #{test_model_forward.1} parent=1 // pred_region
      %s428 = ssub.s32 128, 128
      %429 = vsyncadd [#allocation4], %s428
      %s431 = sshll.u32 [#allocation10], 4
      %s432 = int_to_ptr.vmem [resolvable:$true] %s431
      %434 = dma.vmem_to_hbm [thread:$0]  %s432, 128, %s5, [#allocation4]
    $region41: #{test_model_forward.1} parent=1 // pred_fallthru
      _
    // Predicated region
    $region42: #{test_model_forward.1} parent=1 // pred_check
      _
    $region43: #{test_model_forward.1} parent=1 // pred_check_branch
      %436 = sbr.rel (0) target = $region45
    $region44: #{test_model_forward.1} parent=1 // pred_region
      %437 = dma.done [#allocation4], 128
    $region45: #{test_model_forward.1} parent=1 // pred_fallthru
      _
    %438 = vsyncpa [#allocation3], 1
    %439 = vsyncpa [#allocation6], 1
    %440 = vsyncpa [#allocation9], 1
    %441 = vsyncpa [#allocation4], 1

</llo_original>
